<compile_context>
chip_gen: v7x
topology: tpu7x:2x2x1
jax: 0.10.0
libtpu: 0.0.40
codegen_flags: <defaults>
</compile_context>

<pallas_src>
import functools

import jax
import jax.numpy as jnp
from jax import lax
from jax.experimental import pallas as pl
from jax.experimental.pallas import tpu as pltpu


def _round_up(x, m):
    return ((x + m - 1) // m) * m


def _chip_config():
    """Generation-dependent tiling / parallelism defaults."""
    kind = ""
    try:
        kind = jax.devices()[0].device_kind.lower()
    except Exception:
        pass
    if "v7" in kind:
        # 2 TensorCores/chip, 64 MiB VMEM per TC, 3.2 TB/s HBM.
        return dict(block_bytes=2 << 20, vmem_base=32 << 20, vmem_cap=56 << 20,
                    num_splits=2, core_parallel=True)
    if ("v5" in kind) or ("v6" in kind):
        # single TC, 128 MiB physical VMEM: bigger blocks amortize per-step overhead.
        return dict(block_bytes=4 << 20, vmem_base=64 << 20, vmem_cap=100 << 20,
                    num_splits=1, core_parallel=False)
    # unknown chip: conservative
    return dict(block_bytes=2 << 20, vmem_base=32 << 20, vmem_cap=56 << 20,
                num_splits=1, core_parallel=False)


def _ce_kernel(logits_ref, tgt_ref, out_ref, col_ref, *, row_tile,
               tiles_per_core, total_n, total_tiles):
    core = pl.program_id(0)     # split index (v7x: one split per TensorCore)
    i = pl.program_id(1)        # row-tile sweep for this split

    @pl.when(i == 0)
    def _init():
        out_ref[...] = jnp.zeros_like(out_ref)
        # Class-index iota generated once per split and re-read every step
        # (moves per-element VALU work onto the vld slots, which have slack).
        col_ref[...] = lax.broadcasted_iota(jnp.int32, col_ref.shape, 1)

    tile_idx = core * tiles_per_core + i

    @pl.when(tile_idx < total_tiles)          # skip compute on dead tail tiles
    def _compute():
        x = logits_ref[...]                   # (row_tile, C), native dtype (bf16 stays bf16)
        t = tgt_ref[...]                      # (row_tile, 1) int32
        col = col_ref[...]                    # (row_tile, C) int32 (precomputed iota)

        # Row max and target pick are exact in the native dtype (max, equality,
        # single-nonzero row sum) -> keep 2 of the 3 passes in bf16.
        m = jnp.max(x, axis=-1, keepdims=True).astype(jnp.float32)
        picked = jnp.sum(jnp.where(col == t, x, jnp.zeros_like(x)),
                         axis=-1, keepdims=True).astype(jnp.float32)

        # exp/logsumexp pass in f32 (upcast feeds exp directly; no long-lived
        # full-tile f32 copy as in the previous version).
        e = jnp.exp(x.astype(jnp.float32) - m)
        lse = jnp.log(jnp.sum(e, axis=-1, keepdims=True)) + m

        # Mask rows past the true batch size BEFORE any cross-row reduction
        # (select does not propagate NaN from Pallas' unspecified OOB tail rows).
        row0 = tile_idx * row_tile
        row_ids = row0 + lax.broadcasted_iota(jnp.int32, (row_tile, 1), 0)
        nll = jnp.where(row_ids < total_n, lse - picked, 0.0)

        # Lane-dense accumulator: reduce the per-row NLL column to a scalar and
        # broadcast-add into one resident (1,128) vreg per split (all lanes equal).
        out_ref[...] += jnp.sum(nll, axis=0, keepdims=True)


def classification_loss(logits, target, *, block_bytes=None, num_splits=None):
    """Equivalent to ClassificationLoss(loss='ce_loss')(logits, target)."""
    if target.ndim == 2:
        target = jnp.squeeze(target, axis=1)

    cfg = _chip_config()
    if block_bytes is None:
        block_bytes = cfg["block_bytes"]
    if num_splits is None:
        num_splits = cfg["num_splits"]
    core_parallel = cfg["core_parallel"] and num_splits > 1

    n, num_classes = logits.shape
    itemsize = jnp.dtype(logits.dtype).itemsize
    mult = 16 if itemsize == 2 else 8          # sublane packing (bf16 vs f32)

    # Row tile sized for ~block_bytes per logits block, capped by per-split work.
    ideal = max(1, block_bytes // max(1, num_classes * itemsize))
    ideal = min(ideal, 2048, pl.cdiv(n, num_splits))
    row_tile = max(mult, _round_up(ideal, mult))

    total_tiles = pl.cdiv(n, row_tile)
    tiles_per_core = pl.cdiv(total_tiles, num_splits)
    n_pad = num_splits * tiles_per_core * row_tile

    tgt = target.astype(jnp.int32)
    if n_pad > n:
        tgt = jnp.pad(tgt, (0, n_pad - n))     # tiny pad; padded rows are masked out
    # TODO(synk): a lane-dense target layout ((tiles, row_tile) blocks + in-kernel
    # transpose) would remove the 128x lane padding of this column in VMEM.
    tgt_col = tgt.reshape(n_pad, 1)

    def logits_map(cc, ii):
        tile = cc * tiles_per_core + ii
        # clamp dead tail tiles onto a valid block; their compute is skipped
        return (jnp.minimum(tile, total_tiles - 1), 0)

    def tgt_map(cc, ii):
        return (cc * tiles_per_core + ii, 0)   # targets are padded to cover all tiles

    kernel = functools.partial(
        _ce_kernel, row_tile=row_tile, tiles_per_core=tiles_per_core,
        total_n=n, total_tiles=total_tiles)

    # VMEM budget: logits double-buffer + int32 iota scratch + lane-padded target
    # blocks + headroom for the f32 exp-pass temporaries; bump the scoped limit for
    # very large C (row_tile floored at mult), capped below physical VMEM.
    est = (2 * row_tile * num_classes * itemsize
           + row_tile * num_classes * 4
           + 2 * row_tile * 512
           + 2 * row_tile * num_classes * 4
           + (1 << 20))
    vmem_limit = int(min(cfg["vmem_cap"], max(cfg["vmem_base"], est)))

    def _run(split_semantics):
        return pl.pallas_call(
            kernel,
            out_shape=jax.ShapeDtypeStruct((1, 128 * num_splits), jnp.float32),
            grid_spec=pltpu.PrefetchScalarGridSpec(
                num_scalar_prefetch=0,
                grid=(num_splits, tiles_per_core),
                in_specs=[pl.BlockSpec((row_tile, num_classes), logits_map),
                          pl.BlockSpec((row_tile, 1), tgt_map)],
                out_specs=pl.BlockSpec((1, 128), lambda cc, ii: (0, cc)),
                scratch_shapes=[pltpu.VMEM((row_tile, num_classes), jnp.int32)],
            ),
            compiler_params=pltpu.CompilerParams(
                dimension_semantics=(split_semantics, pltpu.ARBITRARY),
                vmem_limit_bytes=vmem_limit,
            ),
        )(logits, tgt_col)

    if core_parallel:
        # v7x: make the 2-way split provably land on both TensorCores; fall back
        # to plain PARALLEL if CORE_PARALLEL is rejected for this config
        # (fallback applies to the eager path).
        try:
            partials = _run(pltpu.CORE_PARALLEL)
        except Exception:
            partials = _run(pltpu.PARALLEL)
    else:
        partials = _run(pltpu.PARALLEL)

    # Every lane of a split's (1,128) block holds that split's exact NLL sum.
    per_split = partials.reshape(num_splits, 128)[:, 0]
    return jnp.sum(per_split) / jnp.float32(n)


def _reference_ce(logits, target):
    if target.ndim == 2:
        target = jnp.squeeze(target, axis=1)
    logp = jax.nn.log_softmax(logits.astype(jnp.float32), axis=-1)
    nll = -jnp.take_along_axis(logp, target[:, None].astype(jnp.int32), axis=-1)
    return jnp.mean(nll)


if __name__ == "__main__":
    key = jax.random.PRNGKey(0)

    # (batch, num_classes) logits + (batch, 1) integer targets (exercises squeeze)
    for (N, C) in [(16, 32), (13, 10)]:   # second case exercises partial-tile masking
        k1, k2 = jax.random.split(jax.random.fold_in(key, N))
        logits = jax.random.normal(k1, (N, C), dtype=jnp.float32)
        target = jax.random.randint(k2, (N, 1), 0, C, dtype=jnp.int32)

        loss = jax.block_until_ready(classification_loss(logits, target))
        ref = _reference_ce(logits, target)
        assert jnp.allclose(loss, ref, rtol=1e-5, atol=1e-5), (N, C, loss, ref)

    # bf16 ingestion path (row-max / target-pick stay bf16; exp pass in f32)
    k1, k2 = jax.random.split(jax.random.fold_in(key, 99))
    logits_bf16 = jax.random.normal(k1, (16, 32), dtype=jnp.float32).astype(jnp.bfloat16)
    target = jax.random.randint(k2, (16, 1), 0, 32, dtype=jnp.int32)
    loss = jax.block_until_ready(classification_loss(logits_bf16, target))
    ref = _reference_ce(logits_bf16.astype(jnp.float32), target)
    assert jnp.allclose(loss, ref, rtol=1e-5, atol=1e-5), (loss, ref)

    print("KERNEL_OK")
</pallas_src>

<mosaic_0001>
module attributes {stable_mosaic.version = 11 : i64} {
  func.func @_ce_kernel(%arg0: i32, %arg1: i32, %arg2: memref<16x32xf32, #tpu.memory_space<vmem>>, %arg3: memref<16x1xi32, #tpu.memory_space<vmem>>, %arg4: memref<1x128xf32, #tpu.memory_space<vmem>>, %arg5: memref<16x32xi32, #tpu.memory_space<vmem>>) attributes {dimension_semantics = [#tpu.dimension_semantics<parallel>, #tpu.dimension_semantics<arbitrary>], iteration_bounds = array<i64: 1, 1>, scalar_prefetch = 0 : i64, scratch_operands = 1 : i64, tpu.core_type = #tpu.core_type<tc>, window_params = [{transform_indices = @transform_0, window_bounds = array<i64: 16, 32>}, {transform_indices = @transform_1, window_bounds = array<i64: 16, 1>}, {transform_indices = @transform_2, window_bounds = array<i64: 1, 128>}]} {
    %c0_i32 = arith.constant 0 : i32
    %0 = arith.cmpi eq, %arg1, %c0_i32 : i32
    %1 = arith.extui %0 : i1 to i32
    %c0_i32_0 = arith.constant 0 : i32
    %2 = arith.cmpi ne, %1, %c0_i32_0 : i32
    scf.if %2 {
      %cst = arith.constant 0.000000e+00 : f32
      %8 = vector.broadcast %cst : f32 to vector<1x128xf32>
      %c0 = arith.constant 0 : index
      %c0_3 = arith.constant 0 : index
      %9 = vector.load %arg4[%c0, %c0_3] : memref<1x128xf32, #tpu.memory_space<vmem>>, vector<1x128xf32>
      tpu.vector_store %arg4[%c0, %c0_3], %8 {strides = array<i32>} : memref<1x128xf32, #tpu.memory_space<vmem>>, vector<1x128xf32>,
      %10 = tpu.iota {dimensions = array<i32: 1>} : vector<16x32xi32>
      %c0_4 = arith.constant 0 : index
      %c0_5 = arith.constant 0 : index
      %11 = vector.load %arg5[%c0_4, %c0_5] : memref<16x32xi32, #tpu.memory_space<vmem>>, vector<16x32xi32>
      tpu.vector_store %arg5[%c0_4, %c0_5], %10 {strides = array<i32>} : memref<16x32xi32, #tpu.memory_space<vmem>>, vector<16x32xi32>,
    } else {
    }
    %c1_i32 = arith.constant 1 : i32
    %3 = arith.muli %arg0, %c1_i32 : i32
    %4 = arith.addi %3, %arg1 : i32
    %c1_i32_1 = arith.constant 1 : i32
    %5 = arith.cmpi slt, %4, %c1_i32_1 : i32
    %6 = arith.extui %5 : i1 to i32
    %c0_i32_2 = arith.constant 0 : i32
    %7 = arith.cmpi ne, %6, %c0_i32_2 : i32
    scf.if %7 {
      %c0 = arith.constant 0 : index
      %c0_3 = arith.constant 0 : index
      %8 = vector.load %arg2[%c0, %c0_3] : memref<16x32xf32, #tpu.memory_space<vmem>>, vector<16x32xf32>
      %c0_4 = arith.constant 0 : index
      %c0_5 = arith.constant 0 : index
      %9 = vector.load %arg3[%c0_4, %c0_5] : memref<16x1xi32, #tpu.memory_space<vmem>>, vector<16x1xi32>
      %c0_6 = arith.constant 0 : index
      %c0_7 = arith.constant 0 : index
      %10 = vector.load %arg5[%c0_6, %c0_7] : memref<16x32xi32, #tpu.memory_space<vmem>>, vector<16x32xi32>
      %cst = arith.constant dense<0xFF800000> : vector<16xf32>
      %11 = vector.multi_reduction <maximumf>, %8, %cst [1] : vector<16x32xf32> to vector<16xf32>
      %12 = vector.shape_cast %11 : vector<16xf32> to vector<16x1xf32>
      %13 = vector.broadcast %9 : vector<16x1xi32> to vector<16x32xi32>
      %14 = arith.cmpi eq, %10, %13 : vector<16x32xi32>
      %cst_8 = arith.constant 0.000000e+00 : f32
      %15 = vector.broadcast %cst_8 : f32 to vector<16x32xf32>
      %16 = arith.select %14, %8, %15 : vector<16x32xi1>, vector<16x32xf32>
      %cst_9 = arith.constant dense<0.000000e+00> : vector<16xf32>
      %17 = vector.multi_reduction <add>, %16, %cst_9 [1] : vector<16x32xf32> to vector<16xf32>
      %18 = vector.shape_cast %17 : vector<16xf32> to vector<16x1xf32>
      %19 = vector.broadcast %12 : vector<16x1xf32> to vector<16x32xf32>
      %20 = arith.subf %8, %19 : vector<16x32xf32>
      %21 = math.exp %20 : vector<16x32xf32>
      %cst_10 = arith.constant dense<0.000000e+00> : vector<16xf32>
      %22 = vector.multi_reduction <add>, %21, %cst_10 [1] : vector<16x32xf32> to vector<16xf32>
      %23 = vector.shape_cast %22 : vector<16xf32> to vector<16x1xf32>
      %24 = math.log %23 : vector<16x1xf32>
      %25 = arith.addf %24, %12 : vector<16x1xf32>
      %c16_i32 = arith.constant 16 : i32
      %26 = arith.muli %4, %c16_i32 : i32
      %27 = tpu.iota {dimensions = array<i32: 0>} : vector<16x1xi32>
      %28 = vector.broadcast %26 : i32 to vector<16x1xi32>
      %29 = arith.addi %28, %27 : vector<16x1xi32>
      %c16_i32_11 = arith.constant 16 : i32
      %30 = vector.broadcast %c16_i32_11 : i32 to vector<16x1xi32>
      %31 = arith.cmpi slt, %29, %30 : vector<16x1xi32>
      %32 = arith.subf %25, %18 : vector<16x1xf32>
      %cst_12 = arith.constant 0.000000e+00 : f32
      %33 = vector.broadcast %cst_12 : f32 to vector<16x1xf32>
      %34 = arith.select %31, %32, %33 : vector<16x1xi1>, vector<16x1xf32>
      %c0_13 = arith.constant 0 : index
      %c0_14 = arith.constant 0 : index
      %35 = vector.load %arg4[%c0_13, %c0_14] : memref<1x128xf32, #tpu.memory_space<vmem>>, vector<1x128xf32>
      %cst_15 = arith.constant dense<0.000000e+00> : vector<1xf32>
      %36 = vector.multi_reduction <add>, %34, %cst_15 [0] : vector<16x1xf32> to vector<1xf32>
      %37 = vector.shape_cast %36 : vector<1xf32> to vector<1x1xf32>
      %38 = vector.broadcast %37 : vector<1x1xf32> to vector<1x128xf32>
      %39 = arith.addf %35, %38 : vector<1x128xf32>
      %c0_16 = arith.constant 0 : index
      %c0_17 = arith.constant 0 : index
      %40 = vector.load %arg4[%c0_16, %c0_17] : memref<1x128xf32, #tpu.memory_space<vmem>>, vector<1x128xf32>
      tpu.vector_store %arg4[%c0_16, %c0_17], %39 {strides = array<i32>} : memref<1x128xf32, #tpu.memory_space<vmem>>, vector<1x128xf32>,
    } else {
    }
    return
  }
  func.func @transform_0(%arg0: i32, %arg1: i32) -> (i32, i32) {
    %c1_i32 = arith.constant 1 : i32
    %0 = arith.muli %arg0, %c1_i32 : i32
    %1 = arith.addi %0, %arg1 : i32
    %c0_i32 = arith.constant 0 : i32
    %2 = arith.minsi %1, %c0_i32 : i32
    %c0_i32_0 = arith.constant 0 : i32
    %c0_i32_1 = arith.constant 0 : i32
    return %2, %c0_i32_0 : i32, i32
  }
  func.func @transform_1(%arg0: i32, %arg1: i32) -> (i32, i32) {
    %c1_i32 = arith.constant 1 : i32
    %0 = arith.muli %arg0, %c1_i32 : i32
    %1 = arith.addi %0, %arg1 : i32
    %c0_i32 = arith.constant 0 : i32
    %c0_i32_0 = arith.constant 0 : i32
    return %1, %c0_i32 : i32, i32
  }
  func.func @transform_2(%arg0: i32, %arg1: i32) -> (i32, i32) {
    %c0_i32 = arith.constant 0 : i32
    %c0_i32_0 = arith.constant 0 : i32
    return %c0_i32, %arg0 : i32, i32
  }
}

</mosaic_0001>

<llo_original>
// kernel: tpu_custom_call.1
$region0: #{tpu_custom_call.1}
  #allocation0 [shape = 'u32[]', space=smem, size = 0x4, offset = 0x4, fixed_abs, tag = 'smem constant byte address 0x4 - core index']
  #allocation1 [shape = 'u32[144,128]{1,0:T(1,128)}', space=vmem, size = 0x12000, scoped, tag = 'internal scratch']
  #allocation2 [shape = 's32[16,32]{1,0:T(8,128)}', space=vmem, size = 0x2000, scoped, tag = 'scratch operand']
  %s0 = inlined_call_operand.vmem [shape: f32[16,32], index: 0, kind: input, shape index: {}]
  %s1 = inlined_call_operand.vmem [shape: s32[16,1], index: 1, kind: input, shape index: {}]
  %s2 = inlined_call_operand.hbm [shape: f32[1,128], index: 2, kind: output, shape index: {}]
  %s3 = sld [smem:[#allocation0]]
  $region26: #{tpu_custom_call.1} parent=0
    _
  %s5 = ssub.s32 1, %s3
  %s6 = scalar_select 0, %s5, %s3
  $region1: #{tpu_custom_call.1} parent=0
    #allocation3 [shape = 'u8[512]{0}', space=vmem, size = 0x400, scoped, tag = 'output window, operand 0, single buffered']
    #allocation4 [shape = 's32[1]{0}', space=sflag, size = 0x4, scoped, tag = 'scoped memory for tpu_custom_call.1']
    %7 = vsyncpa [#allocation4], 0
    // Predicated region
    $region2: #{tpu_custom_call.1} parent=1 // pred_check
      _
    $region3: #{tpu_custom_call.1} parent=1 // pred_check_branch
      %9 = sbr.rel (0) target = $region5
    $region4: #{tpu_custom_call.1} parent=1 // pred_region
      %s10 = sadd.s32 0, 0
      %p11 = scmp.lt.s32.totalorder %s10, 0
      %s12 = scalar_select %p11, %s10, 0
      %s13 = smul.u32 2, %s12
      %p14 = scmp.lt.s32.totalorder %s13, 1
      %s15 = scalar_select %p14, %s13, 1
      %s16 = smul.addr %s15, 8
      %s17 = scalar_lea.vmem %s0, %s16
      %s18 = sadd.s32 0, 0
      %p19 = scmp.lt.s32.totalorder %s18, 0
      %s20 = scalar_select %p19, %s18, 0
      %s21 = smul.u32 2, %s20
    $region5: #{tpu_custom_call.1} parent=1 // pred_fallthru
      _
    // Predicated region
    $region6: #{tpu_custom_call.1} parent=1 // pred_check
      _
    $region7: #{tpu_custom_call.1} parent=1 // pred_check_branch
      %23 = sbr.rel (0) target = $region9
    $region8: #{tpu_custom_call.1} parent=1 // pred_region
      %s24 = sadd.s32 0, 0
      %s25 = smul.u32 2, %s24
      %p26 = scmp.lt.s32.totalorder %s25, 1
      %s27 = scalar_select %p26, %s25, 1
      %s28 = smul.addr %s27, 8
      %s29 = scalar_lea.vmem %s1, %s28
      %s30 = sadd.s32 0, 0
      %s31 = smul.u32 2, %s30
    $region9: #{tpu_custom_call.1} parent=1 // pred_fallthru
      _
    %s32 = sadd.s32 0, 0
    %p33 = scmp.lt.s32.totalorder %s32, 0
    %s34 = scalar_select %p33, %s32, 0
    %s35 = smul.u32 2, %s34
    %p36 = scmp.lt.s32.totalorder %s35, 1
    %s37 = scalar_select %p36, %s35, 1
    %s38 = smul.addr %s37, 8
    %s39 = scalar_lea.vmem %s0, %s38
    %s40 = sadd.s32 0, 0
    %s41 = smul.u32 2, %s40
    %p42 = scmp.lt.s32.totalorder %s41, 1
    %s43 = scalar_select %p42, %s41, 1
    %s44 = smul.addr %s43, 8
    %s45 = scalar_lea.vmem %s1, %s44
    %s46 = sadd.s32 0, 0
    %p47 = scmp.lt.s32.totalorder %s46, 0
    %s48 = scalar_select %p47, %s46, 0
    %s49 = smul.u32 2, %s48
    %p50 = scmp.lt.s32.totalorder %s49, 1
    %s51 = scalar_select %p50, %s49, 1
    %s52 = smul.addr %s51, 8
    %s53 = scalar_lea.vmem %s0, %s52
    %s54 = sadd.s32 0, 0
    %p55 = scmp.lt.s32.totalorder %s54, 0
    %s56 = scalar_select %p55, %s54, 0
    %s57 = smul.u32 2, %s56
    %s58 = sadd.s32 0, 0
    %s59 = smul.u32 2, %s58
    %p60 = scmp.lt.s32.totalorder %s59, 1
    %s61 = scalar_select %p60, %s59, 1
    %s62 = smul.addr %s61, 8
    %s63 = scalar_lea.vmem %s1, %s62
    %s64 = sadd.s32 0, 0
    %s65 = smul.u32 2, %s64
    %p66 = scmp.eq.s32.totalorder 0, 0
    // Predicated region
    $region10: #{tpu_custom_call.1} parent=1 // pred_check
      %p67 = pneg %p66
    $region11: #{tpu_custom_call.1} parent=1 // pred_check_branch
      %69 = sbr.rel (%p67) target = $region13
    $region12: #{tpu_custom_call.1} parent=1 // pred_region
      %70 = vst [vmem:[#allocation3] sm:$0x1] 0.0
      %v71 = vlaneseq
      %v72 = vand.u32 %v71, 127
      %vm73 = vcmask 261120
      %74 = vst.msk [vmem:[#allocation2] sm:$0xff] %vm73, %v72
      %75 = vst.msk [vmem:[#allocation2 + $0x8] sm:$0xff] %vm73, %v72
    $region13: #{tpu_custom_call.1} parent=1 // pred_fallthru
      _
    %s76 = sadd.s32 0, 0
    %p77 = scmp.lt.s32.totalorder %s76, 1
    // Predicated region
    $region14: #{tpu_custom_call.1} parent=1 // pred_check
      %p78 = pneg %p77
    $region15: #{tpu_custom_call.1} parent=1 // pred_check_branch
      %80 = sbr.rel (%p78) target = $region17
    $region16: #{tpu_custom_call.1} parent=1 // pred_region
      %v81 = vld [vmem:[%s53] sm:$0xff]
      %v82 = vld [vmem:[%s53 + $0x8] sm:$0xff]
      %v83 = vld [vmem:[%s63] sm:$0xff]
      %v84 = vld [vmem:[%s63 + $0x8] sm:$0xff]
      %v85 = vld [vmem:[#allocation2] sm:$0xff]
      %v86 = vld [vmem:[#allocation2 + $0x8] sm:$0xff]
      %vm87 = vcmask 261120
      %v88 = vsel %vm87, %v81, -inf
      %89 = vmax.xlane.f32.xlu0 %v88
      %v90 = vpop.xlane.xlu0 %89
      %v91 = vsel %vm87, %v82, -inf
      %92 = vmax.xlane.f32.xlu0 %v91
      %v93 = vpop.xlane.xlu0 %92
      %94 = vset.pattern.permute.xlu0 0
      %95 = vperm.xlu0 %94, %v83
      %v96 = vpop.permute.xlu0 %95
      %97 = vset.pattern.permute.xlu0 0
      %98 = vperm.xlu0 %97, %v84
      %v99 = vpop.permute.xlu0 %98
      %vm100 = vcmp.eq.s32.totalorder %v85, %v96
      %vm101 = vcmp.eq.s32.totalorder %v86, %v99
      %v102 = vsel %vm100, %v81, 0.0
      %v103 = vsel %vm101, %v82, 0.0
      %v104 = vsel %vm87, %v102, 0.0
      %105 = vadd.xlane.f32.xlu0 %v104
      %v106 = vpop.xlane.xlu0 %105
      %v107 = vsel %vm87, %v103, 0.0
      %108 = vadd.xlane.f32.xlu0 %v107
      %v109 = vpop.xlane.xlu0 %108
      %v110 = vsub.f32 %v81, %v90
      %v111 = vsub.f32 %v82, %v93
      %v112 = vmul.f32 %v110, 1.442695
      %v113 = vpow.pop %v112
      %v114 = vmul.f32 %v111, 1.442695
      %v115 = vpow.pop %v114
      %v116 = vsel %vm87, %v113, 0.0
      %117 = vadd.xlane.f32.xlu0 %v116
      %v118 = vpop.xlane.xlu0 %117
      %v119 = vsel %vm87, %v115, 0.0
      %120 = vadd.xlane.f32.xlu0 %v119
      %v121 = vpop.xlane.xlu0 %120
      %v122 = vlog2.pop %v118
      %v123 = vmul.f32 %v122, 0.6931472
      %v124 = vlog2.pop %v121
      %v125 = vmul.f32 %v124, 0.6931472
      %v126 = vadd.f32 %v123, %v90
      %v127 = vadd.f32 %v125, %v93
      %s128 = smul.u32 %s76, 16
      %v129 = vlaneseq
      %v130 = vshrl.u32 %v129, 7
      %v131 = vadd.s32 %v130, 8
      %v132 = vstv %s128
      %v133 = vadd.s32 %v132, %v130
      %v134 = vadd.s32 %v132, %v131
      %vm135 = vcmp.lt.s32.totalorder %v133, 16
      %vm136 = vcmp.lt.s32.totalorder %v134, 16
      %v137 = vsub.f32 %v126, %v106
      %v138 = vsub.f32 %v127, %v109
      %v139 = vsel %vm135, %v137, 0.0
      %v140 = vsel %vm136, %v138, 0.0
      %v141 = vld [vmem:[#allocation3] sm:$0x1]
      %v142 = vadd.f32 %v139, %v140
      %v143 = vrot.slane %v142, 4
      %v144 = vadd.f32 %v142, %v143
      %v145 = vrot.slane %v144, 2
      %v146 = vadd.f32 %v144, %v145
      %v147 = vrot.slane %v146, 1
      %v148 = vadd.f32 %v146, %v147
      %v149 = vadd.f32 %v141, %v148
      %150 = vst [vmem:[#allocation3] sm:$0x1] %v149
    $region17: #{tpu_custom_call.1} parent=1 // pred_fallthru
      _
    // Predicated region
    $region18: #{tpu_custom_call.1} parent=1 // pred_check
      _
    $region19: #{tpu_custom_call.1} parent=1 // pred_check_branch
      %152 = sbr.rel (0) target = $region21
    $region20: #{tpu_custom_call.1} parent=1 // pred_region
      %s154 = ssub.s32 16, 16
      %155 = vsyncadd [#allocation4], %s154
      %s157 = sshll.u32 [#allocation3], 4
      %s158 = int_to_ptr.vmem [resolvable:$true] %s157
      %160 = dma.vmem_to_hbm [thread:$0]  %s158, 16, %s2, [#allocation4]
    $region21: #{tpu_custom_call.1} parent=1 // pred_fallthru
      _
    // Predicated region
    $region22: #{tpu_custom_call.1} parent=1 // pred_check
      _
    $region23: #{tpu_custom_call.1} parent=1 // pred_check_branch
      %162 = sbr.rel (0) target = $region25
    $region24: #{tpu_custom_call.1} parent=1 // pred_region
      %163 = dma.done [#allocation4], 16
    $region25: #{tpu_custom_call.1} parent=1 // pred_fallthru
      _
    %164 = vsyncpa [#allocation4], 1

</llo_original>
